<compile_context>
chip_gen: v5e
topology: v5e:2x2
jax: 0.10.0
libtpu: 0.0.40
codegen_flags: <defaults>
</compile_context>

<pallas_src>
import functools

import jax
import jax.numpy as jnp
from jax.experimental import pallas as pl
from jax.experimental.pallas import tpu as pltpu


# ----------------------------------------------------------------------------
# Kernel
# ----------------------------------------------------------------------------
def _tno_kernel(w_ref, x_ref, o_ref, acc_ref, *, n, row_tile, causal):
    """One grid step computes one (row_tile, chan_tile) block of the output.

    w_ref  : (Lw, tc)  coefficient slab  W[p] = t_{p-(n-1)}  (zero padded)
    x_ref  : (n,  tc)  input slab for this channel tile (all positions j)
    o_ref  : (tm, tc)  output row tile
    acc_ref: (tm, tc)  f32 accumulator scratch
    """
    i0 = pl.program_id(1) * row_tile
    acc_ref[...] = jnp.zeros_like(acc_ref)

    def body(j, carry):
        def accumulate():
            # T[i, j] = W[(n-1) + i - j]; for rows [i0, i0+row_tile) this is a
            # contiguous (row_tile, tc) window of W starting at n-1+i0-j.
            start = n - 1 + i0 - j
            coeff = w_ref[pl.ds(start, row_tile), :].astype(jnp.float32)
            xrow = x_ref[pl.ds(j, 1), :].astype(jnp.float32)      # (1, tc)
            acc_ref[...] += coeff * xrow                          # VALU FMA

        if causal:
            # Only j <= i contributes (neg coefficients are zero anyway);
            # skip the upper-triangular half of the work for this row tile.
            pl.when(j < i0 + row_tile)(accumulate)
        else:
            accumulate()
        return carry

    jax.lax.fori_loop(0, n, body, 0)
    o_ref[...] = acc_ref[...].astype(o_ref.dtype)


# ----------------------------------------------------------------------------
# Tile selection
# ----------------------------------------------------------------------------
def _choose_tiles(n, c, itemsize, vmem_budget=12 * 1024 * 1024):
    """Pick (row_tile, chan_tile) for the folded (n, c) problem."""

    def blocks_bytes(tc, tm):
        ni = pl.cdiv(n, tm)
        lw = n - 1 + ni * tm            # padded coefficient slab length
        # W + x + out blocks (double buffered) + f32 accumulator scratch.
        return 2 * (lw + n + tm) * tc * itemsize + tm * tc * 4

    # Channel (lane) tile: full c when small, otherwise a multiple of 128.
    if c <= 512:
        cands = [c] + [m for m in (256, 128) if m < c]
    else:
        cands = [512, 384, 256, 128]
    tc = cands[-1]
    for cand in cands:
        if blocks_bytes(cand, 8) <= vmem_budget:
            tc = cand
            break

    # Row tile: keep the f32 accumulator tile around <= 64 KiB.
    tm = max(8, min(256, (64 * 1024) // (4 * tc)))
    if tm >= n:
        tm = n
    else:
        tm -= tm % 8
        while tm > 8 and blocks_bytes(tc, tm) > vmem_budget:
            tm -= 8
    return tm, tc


# ----------------------------------------------------------------------------
# Wrapper
# ----------------------------------------------------------------------------
@functools.partial(jax.jit, static_argnames=("causal",))
def tno_matrix(x, t, causal=False):
    """Pallas equivalent of TnoMatrix.forward.  x: (b, n, d), t: (2n, d)."""
    b, n, d = x.shape
    out_dtype = x.dtype
    itemsize = x.dtype.itemsize

    # ---- coefficient vector W[p] = t_{p-(n-1)}  (shape (2n-1, d)) ----------
    t0 = t[0:1]                                        # t_0
    pos = t[1:n]                                       # t_1 .. t_{n-1}
    neg = jnp.zeros_like(pos) if causal else t[n + 1:2 * n]  # t_{-(n-1)} .. t_{-1}
    w = jnp.concatenate([neg, t0, pos], axis=0)        # (2n-1, d)

    # ---- fold batch into the channel / lane axis: (b, n, d) -> (n, b*d) ----
    c = b * d
    x2 = jnp.transpose(x, (1, 0, 2)).reshape(n, c)

    tm, tc = _choose_tiles(n, c, itemsize)
    ni = pl.cdiv(n, tm)
    nc = pl.cdiv(c, tc)

    # Pad W so the per-j (tm, tc) windows of the last row tile never run OOB.
    lw = n - 1 + ni * tm
    pad = lw - (2 * n - 1)
    if pad > 0:
        w = jnp.concatenate([w, jnp.zeros((pad, d), w.dtype)], axis=0)
    w2 = jnp.tile(w, (1, b))                           # (lw, b*d), matches folding

    kernel = functools.partial(_tno_kernel, n=n, row_tile=tm, causal=causal)

    macs = b * n * n * d
    out2 = pl.pallas_call(
        kernel,
        out_shape=jax.ShapeDtypeStruct((n, c), out_dtype),
        grid=(nc, ni),                                  # row tiles innermost
        in_specs=[
            pl.BlockSpec((lw, tc), lambda ci, ii: (0, ci)),   # W (chan tile only)
            pl.BlockSpec((n, tc), lambda ci, ii: (0, ci)),    # x (chan tile only)
        ],
        out_specs=pl.BlockSpec((tm, tc), lambda ci, ii: (ii, ci)),
        scratch_shapes=[pltpu.VMEM((tm, tc), jnp.float32)],
        compiler_params=pltpu.CompilerParams(
            dimension_semantics=("parallel", "parallel"),
            vmem_limit_bytes=32 * 1024 * 1024,
        ),
        cost_estimate=pl.CostEstimate(
            flops=(macs if causal else 2 * macs),
            transcendentals=0,
            bytes_accessed=(x2.size + n * c + w2.size) * itemsize,
        ),
    )(w2, x2)

    # unfold: (n, b*d) -> (b, n, d)
    return jnp.transpose(out2.reshape(n, b, d), (1, 0, 2))


# ----------------------------------------------------------------------------
# Pure-JAX reference (mirrors the PyTorch construction exactly)
# ----------------------------------------------------------------------------
def _build_toeplitz_coeffs(t, n, causal):
    zero = t[0:1]
    pos = t[1:n]
    neg = jnp.zeros_like(pos) if causal else t[n + 1:2 * n]
    col = jnp.concatenate([zero, pos], axis=0)            # [t0, t1, ..., t_{n-1}]
    row = jnp.concatenate([zero, neg[::-1]], axis=0)      # [t0, t_{-1}, ..., t_{-(n-1)}]
    vals = jnp.concatenate([row, col[1:][::-1]], axis=0)  # (2n-1, d)
    idx = (jnp.arange(n)[None, :] - jnp.arange(n)[:, None]) % (2 * n - 1)
    return vals[idx]                                       # (n, n, d), T[i, j] = t_{i-j}


def _reference(x, t, causal=False):
    n = x.shape[1]
    t_matrix = _build_toeplitz_coeffs(t, n, causal)
    return jnp.einsum("nmd,bmd->bnd", t_matrix, x,
                      precision=jax.lax.Precision.HIGHEST)


# ----------------------------------------------------------------------------
# Self-test
# ----------------------------------------------------------------------------
if __name__ == "__main__":
    key = jax.random.PRNGKey(0)

    # (b, n, d): small shape plus one that exercises row tiling / padding.
    for (b, n, d) in ((2, 8, 32), (3, 200, 96)):
        kx, kt = jax.random.split(jax.random.fold_in(key, n))
        x = jax.random.normal(kx, (b, n, d), dtype=jnp.float32)
        t = jax.random.normal(kt, (2 * n, d), dtype=jnp.float32)
        for causal in (False, True):
            o = jax.block_until_ready(tno_matrix(x, t, causal=causal))
            o_ref = jax.block_until_ready(_reference(x, t, causal=causal))
            assert o.shape == (b, n, d)
            assert jnp.allclose(o, o_ref, atol=1e-2, rtol=1e-2), (
                f"mismatch b={b} n={n} d={d} causal={causal}"
            )

    print("KERNEL_OK")
</pallas_src>

<mosaic_0001>
module attributes {stable_mosaic.version = 11 : i64} {
  func.func @_tno_kernel(%arg0: i32, %arg1: i32, %arg2: memref<15x64xf32, #tpu.memory_space<vmem>>, %arg3: memref<8x64xf32, #tpu.memory_space<vmem>>, %arg4: memref<8x64xf32, #tpu.memory_space<vmem>>, %arg5: memref<8x64xf32, #tpu.memory_space<vmem>>) attributes {dimension_semantics = [#tpu.dimension_semantics<parallel>, #tpu.dimension_semantics<parallel>], iteration_bounds = array<i64: 1, 1>, scalar_prefetch = 0 : i64, scratch_operands = 1 : i64, tpu.core_type = #tpu.core_type<tc>, window_params = [{transform_indices = @transform_0, window_bounds = array<i64: 15, 64>}, {transform_indices = @transform_1, window_bounds = array<i64: 8, 64>}, {transform_indices = @transform_2, window_bounds = array<i64: 8, 64>}]} {
    %c8_i32 = arith.constant 8 : i32
    %0 = arith.muli %arg1, %c8_i32 : i32
    %cst = arith.constant 0.000000e+00 : f32
    %1 = vector.broadcast %cst : f32 to vector<8x64xf32>
    %c0 = arith.constant 0 : index
    %c0_0 = arith.constant 0 : index
    %2 = vector.load %arg5[%c0, %c0_0] : memref<8x64xf32, #tpu.memory_space<vmem>>, vector<8x64xf32>
    tpu.vector_store %arg5[%c0, %c0_0], %1 {strides = array<i32>} : memref<8x64xf32, #tpu.memory_space<vmem>>, vector<8x64xf32>,
    %c0_i32 = arith.constant 0 : i32
    %c8_i32_1 = arith.constant 8 : i32
    %3 = arith.addi %c0_i32, %c8_i32_1 : i32
    %c1_i32 = arith.constant 1 : i32
    scf.for %arg6 = %c0_i32 to %3 step %c1_i32  : i32 {
      %c7_i32 = arith.constant 7 : i32
      %6 = arith.addi %c7_i32, %0 : i32
      %7 = arith.subi %6, %arg6 : i32
      %8 = arith.index_cast %7 : i32 to index
      %c0_7 = arith.constant 0 : index
      %9 = vector.load %arg2[%8, %c0_7] : memref<15x64xf32, #tpu.memory_space<vmem>>, vector<8x64xf32>
      %10 = arith.index_cast %arg6 : i32 to index
      %c0_8 = arith.constant 0 : index
      %11 = vector.load %arg3[%10, %c0_8] : memref<8x64xf32, #tpu.memory_space<vmem>>, vector<1x64xf32>
      %c0_9 = arith.constant 0 : index
      %c0_10 = arith.constant 0 : index
      %12 = vector.load %arg5[%c0_9, %c0_10] : memref<8x64xf32, #tpu.memory_space<vmem>>, vector<8x64xf32>
      %13 = vector.broadcast %11 : vector<1x64xf32> to vector<8x64xf32>
      %14 = arith.mulf %9, %13 : vector<8x64xf32>
      %15 = arith.addf %12, %14 : vector<8x64xf32>
      %c0_11 = arith.constant 0 : index
      %c0_12 = arith.constant 0 : index
      %16 = vector.load %arg5[%c0_11, %c0_12] : memref<8x64xf32, #tpu.memory_space<vmem>>, vector<8x64xf32>
      tpu.vector_store %arg5[%c0_11, %c0_12], %15 {strides = array<i32>} : memref<8x64xf32, #tpu.memory_space<vmem>>, vector<8x64xf32>,
    }
    %c8_i32_2 = arith.constant 8 : i32
    %c0_3 = arith.constant 0 : index
    %c0_4 = arith.constant 0 : index
    %4 = vector.load %arg5[%c0_3, %c0_4] : memref<8x64xf32, #tpu.memory_space<vmem>>, vector<8x64xf32>
    %c0_5 = arith.constant 0 : index
    %c0_6 = arith.constant 0 : index
    %5 = vector.load %arg4[%c0_5, %c0_6] : memref<8x64xf32, #tpu.memory_space<vmem>>, vector<8x64xf32>
    tpu.vector_store %arg4[%c0_5, %c0_6], %4 {strides = array<i32>} : memref<8x64xf32, #tpu.memory_space<vmem>>, vector<8x64xf32>,
    return
  }
  func.func @transform_0(%arg0: i32, %arg1: i32) -> (i32, i32) {
    %c0_i32 = arith.constant 0 : i32
    %c0_i32_0 = arith.constant 0 : i32
    return %c0_i32, %arg0 : i32, i32
  }
  func.func @transform_1(%arg0: i32, %arg1: i32) -> (i32, i32) {
    %c0_i32 = arith.constant 0 : i32
    %c0_i32_0 = arith.constant 0 : i32
    return %c0_i32, %arg0 : i32, i32
  }
  func.func @transform_2(%arg0: i32, %arg1: i32) -> (i32, i32) {
    %c0_i32 = arith.constant 0 : i32
    return %arg1, %arg0 : i32, i32
  }
}

</mosaic_0001>

<llo_original>
// kernel: tile.9
$region0: #{tile.9}
  %s0 = inlined_call_operand.vmem [shape: f32[15,2,32], index: 0, kind: input, shape index: {}]
  %s1 = inlined_call_operand.vmem [shape: f32[15,64], index: 1, kind: output, shape index: {}]
  $region1: #{tile.9} parent=0
    #allocation0 [shape = 'u8[61440]{0}', space=vmem, size = 0xf000, scoped, tag = 'scoped mem for input reshape']
    %s3 = ssub.s32 4, 1
    %s4 = scalar_lea.vmem %s0, 28
    %v5 = vld [vmem:[%s4] sm:%s3]
    %s6 = scalar_lea.vmem [#allocation0], 112
    %7 = vst [vmem:[%s6] sm:%s3] %v5
    %s8 = scalar_lea.vmem %s0, 26
    %v9 = vld [vmem:[%s8] sm:%s3]
    %s10 = scalar_lea.vmem [#allocation0], 104
    %11 = vst [vmem:[%s10] sm:%s3] %v9
    %s12 = scalar_lea.vmem %s0, 24
    %v13 = vld [vmem:[%s12] sm:%s3]
    %s14 = scalar_lea.vmem [#allocation0], 96
    %15 = vst [vmem:[%s14] sm:%s3] %v13
    %s16 = scalar_lea.vmem %s0, 22
    %v17 = vld [vmem:[%s16] sm:%s3]
    %s18 = scalar_lea.vmem [#allocation0], 88
    %19 = vst [vmem:[%s18] sm:%s3] %v17
    %s20 = scalar_lea.vmem %s0, 20
    %v21 = vld [vmem:[%s20] sm:%s3]
    %s22 = scalar_lea.vmem [#allocation0], 80
    %23 = vst [vmem:[%s22] sm:%s3] %v21
    %s24 = scalar_lea.vmem %s0, 18
    %v25 = vld [vmem:[%s24] sm:%s3]
    %s26 = scalar_lea.vmem [#allocation0], 72
    %27 = vst [vmem:[%s26] sm:%s3] %v25
    %s28 = scalar_lea.vmem %s0, 16
    %v29 = vld [vmem:[%s28] sm:%s3]
    %s30 = scalar_lea.vmem [#allocation0], 64
    %31 = vst [vmem:[%s30] sm:%s3] %v29
    %s32 = scalar_lea.vmem %s0, 14
    %v33 = vld [vmem:[%s32] sm:%s3]
    %s34 = scalar_lea.vmem [#allocation0], 56
    %35 = vst [vmem:[%s34] sm:%s3] %v33
    %s36 = scalar_lea.vmem %s0, 12
    %v37 = vld [vmem:[%s36] sm:%s3]
    %s38 = scalar_lea.vmem [#allocation0], 48
    %39 = vst [vmem:[%s38] sm:%s3] %v37
    %s40 = scalar_lea.vmem %s0, 10
    %v41 = vld [vmem:[%s40] sm:%s3]
    %s42 = scalar_lea.vmem [#allocation0], 40
    %43 = vst [vmem:[%s42] sm:%s3] %v41
    %s44 = scalar_lea.vmem %s0, 8
    %v45 = vld [vmem:[%s44] sm:%s3]
    %s46 = scalar_lea.vmem [#allocation0], 32
    %47 = vst [vmem:[%s46] sm:%s3] %v45
    %s48 = scalar_lea.vmem %s0, 6
    %v49 = vld [vmem:[%s48] sm:%s3]
    %s50 = scalar_lea.vmem [#allocation0], 24
    %51 = vst [vmem:[%s50] sm:%s3] %v49
    %s52 = scalar_lea.vmem %s0, 4
    %v53 = vld [vmem:[%s52] sm:%s3]
    %s54 = scalar_lea.vmem [#allocation0], 16
    %55 = vst [vmem:[%s54] sm:%s3] %v53
    %s56 = scalar_lea.vmem %s0, 2
    %v57 = vld [vmem:[%s56] sm:%s3]
    %s58 = scalar_lea.vmem [#allocation0], 8
    %59 = vst [vmem:[%s58] sm:%s3] %v57
    %v60 = vld [vmem:[%s0] sm:%s3]
    %61 = vst [vmem:[#allocation0] sm:%s3] %v60
    %v62 = vld [vmem:[#allocation0] ss:$8 sm:$0xf]
    %v63 = vld [vmem:[#allocation0] ss:$8 sm:$0xf0]
    %vm64 = vcmask 1047556
    %v65 = vsel %vm64, %v63, %v62
    %vm66 = vcmask 261120
    %67 = vst.msk [vmem:[%s1] sm:$0xff] %vm66, %v65
    %s68 = scalar_lea.vmem [#allocation0], 64
    %v69 = vld [vmem:[%s68] ss:$8 sm:$0xf]
    %s70 = scalar_lea.vmem [#allocation0], 64
    %v71 = vld [vmem:[%s70] ss:$8 sm:$0x70]
    %vm72 = vcmask 1046532
    %v73 = vsel %vm72, %v71, %v69
    %vm74 = vcmask 261120
    %s75 = scalar_lea.vmem %s1, 8
    %76 = vst.msk [vmem:[%s75] sm:$0x7f] %vm74, %v73
    %s77 = scalar_lea.vmem [#allocation0], 1
    %v78 = vld [vmem:[%s77] ss:$8 sm:$0xf]
    %s79 = scalar_lea.vmem [#allocation0], 1
    %v80 = vld [vmem:[%s79] ss:$8 sm:$0xf0]
    %vm81 = vcmask 1047556
    %v82 = vsel %vm81, %v80, %v78
    %83 = vrot.lane.b32.xlu0 %v82, 32
    %v84 = vpop.permute.xlu0 %83
    %vm85 = vcmask 523520
    %86 = vst.msk [vmem:[%s1] sm:$0xff] %vm85, %v84
    %s87 = scalar_lea.vmem [#allocation0], 65
    %v88 = vld [vmem:[%s87] ss:$8 sm:$0xf]
    %s89 = scalar_lea.vmem [#allocation0], 65
    %v90 = vld [vmem:[%s89] ss:$8 sm:$0x70]
    %vm91 = vcmask 1046532
    %v92 = vsel %vm91, %v90, %v88
    %93 = vrot.lane.b32.xlu0 %v92, 32
    %v94 = vpop.permute.xlu0 %93
    %vm95 = vcmask 523520
    %s96 = scalar_lea.vmem %s1, 8
    %97 = vst.msk [vmem:[%s96] sm:$0x7f] %vm95, %v94

// kernel: tno_matrix.1
$region0: #{tno_matrix.1}
  #allocation0 [shape = 'u32[]', space=smem, size = 0x4, offset = 0x4, fixed_abs, tag = 'smem constant byte address 0x4 - core index']
  #allocation1 [shape = 'u32[72,128]{1,0:T(1,128)}', space=vmem, size = 0x9000, scoped, tag = 'internal scratch']
  #allocation2 [shape = 'f32[8,64]{1,0:T(8,128)}', space=vmem, size = 0x1000, scoped, tag = 'scratch operand']
  %s0 = inlined_call_operand.vmem [shape: f32[15,64], index: 0, kind: input, shape index: {}]
  %s1 = inlined_call_operand.vmem [shape: f32[8,64], index: 1, kind: input, shape index: {}]
  %s2 = inlined_call_operand.vmem [shape: f32[8,64], index: 2, kind: output, shape index: {}]
  %s3 = sld [smem:[#allocation0]]
  $region25: #{tno_matrix.1} parent=0
    _
  %s5 = ssub.s32 1, %s3
  %s6 = scalar_select 0, %s5, %s3
  // Predicated region
  $region2: #{tno_matrix.1} parent=0 // pred_check
    _
  $region3: #{tno_matrix.1} parent=0 // pred_check_branch
    %8 = sbr.rel (0) target = $region5
  $region4: #{tno_matrix.1} parent=0 // pred_region
    _
  $region5: #{tno_matrix.1} parent=0 // pred_fallthru
    _
  // Predicated region
  $region6: #{tno_matrix.1} parent=0 // pred_check
    _
  $region7: #{tno_matrix.1} parent=0 // pred_check_branch
    %10 = sbr.rel (0) target = $region9
  $region8: #{tno_matrix.1} parent=0 // pred_region
    _
  $region9: #{tno_matrix.1} parent=0 // pred_fallthru
    _
  %s11 = smul.u32 0, 8
  %vm12 = vcmask 523264
  %13 = vst.msk [vmem:[#allocation2] sm:$0xff] %vm12, 0.0
  loop: start=0, step=1, limit=8
  $region10: #{tno_matrix.1} parent=0 // loop_pre_header
    _
  $region11: #{tno_matrix.1} parent=0 // loop_header
    %s15 = sphi 0, %s19
    %p16 = scmp.ge.s32.totalorder %s15, 8
  $region12: #{tno_matrix.1} parent=0 // loop_header_branch
    %18 = sbr.rel (%p16) target = $region16
  $region13: #{tno_matrix.1} parent=0 // loop_body
    %s20 = sadd.s32 %s11, 7
    %s21 = ssub.s32 %s20, %s15
    %s22 = scalar_lea.vmem %s0, %s21
    %v23 = vld [vmem:[%s22] sm:$0xff]
    %s24 = scalar_lea.vmem %s1, %s15
    %v25 = vld [vmem:[%s24] sm:$0x1]
    %v26 = vld [vmem:[#allocation2] sm:$0xff]
    %v27 = vperm.slane %v25, 0
    %v28 = vmul.f32 %v23, %v27
    %v29 = vadd.f32 %v26, %v28
    %30 = vst.msk [vmem:[#allocation2] sm:$0xff] %vm12, %v29
  $region14: #{tno_matrix.1} parent=0 // loop_footer
    %s19 = sadd.s32 1, %s15
  $region15: #{tno_matrix.1} parent=0 // loop_footer_branch
    %14 = sbr.rel target = $region11
  $region16: #{tno_matrix.1} parent=0 // loop_exit
    _
  %v31 = vld [vmem:[#allocation2] sm:$0xff]
  %32 = vst.msk [vmem:[%s2] sm:$0xff] %vm12, %v31
  // Predicated region
  $region17: #{tno_matrix.1} parent=0 // pred_check
    _
  $region18: #{tno_matrix.1} parent=0 // pred_check_branch
    %34 = sbr.rel (0) target = $region20
  $region19: #{tno_matrix.1} parent=0 // pred_region
    _
  $region20: #{tno_matrix.1} parent=0 // pred_fallthru
    _
  // Predicated region
  $region21: #{tno_matrix.1} parent=0 // pred_check
    _
  $region22: #{tno_matrix.1} parent=0 // pred_check_branch
    %36 = sbr.rel (0) target = $region24
  $region23: #{tno_matrix.1} parent=0 // pred_region
    _
  $region24: #{tno_matrix.1} parent=0 // pred_fallthru
    _

</llo_original>
